<compile_context>
chip_gen: v7x
topology: tpu7x:2x2x1
jax: 0.10.0
libtpu: 0.0.40
codegen_flags: <defaults>
</compile_context>

<pallas_src>
import math

import jax
import jax.numpy as jnp
from jax.experimental import pallas as pl
from jax.experimental.pallas import tpu as pltpu

_LANE = 128
_VMEM_WORKING_SET_BUDGET = 34 * 1024 * 1024  # double-buffered tile footprint target
_VMEM_LIMIT_BYTES = 48 * 1024 * 1024         # <= v7x 64 MiB/TC, above v5e/v6e scoped defaults
_TINY_FLOP_FALLBACK = 1 << 22                # below ~4 MFLOP, plain XLA wins


def _round_up(x: int, m: int) -> int:
    return ((x + m - 1) // m) * m


def _sublane_granule(dtype) -> int:
    # f32 -> 8 rows per vreg sublane tile, bf16 -> 16, int8/fp8 -> 32.
    itemsize = jnp.dtype(dtype).itemsize
    return max(8, 8 * (4 // max(1, itemsize)))


# ---------------------------------------------------------------------------
# Kernels
# ---------------------------------------------------------------------------

def _head_kernel_single_k(x_ref, wt_ref, b_ref, o_ref):
    # Whole reduction in one step: out tile = x @ W^T + b, no accumulator.
    acc = jnp.dot(x_ref[...], wt_ref[...], preferred_element_type=jnp.float32)
    o_ref[...] = (acc + b_ref[...]).astype(o_ref.dtype)


def _head_kernel_multi_k(x_ref, wt_ref, b_ref, o_ref, acc_ref):
    k = pl.program_id(2)
    prod = jnp.dot(x_ref[...], wt_ref[...], preferred_element_type=jnp.float32)

    @pl.when(k == 0)
    def _():
        acc_ref[...] = prod            # direct write: no zero-store + read-add

    @pl.when(k > 0)
    def _():
        acc_ref[...] += prod

    @pl.when(k == pl.num_programs(2) - 1)
    def _():
        o_ref[...] = (acc_ref[...] + b_ref[...]).astype(o_ref.dtype)


# ---------------------------------------------------------------------------
# Tiling selection
# ---------------------------------------------------------------------------

def _select_tiling(B, C, H, in_dtype, out_dtype, tm_req, tn_req, tk_req):
    itemsize = jnp.dtype(in_dtype).itemsize
    out_itemsize = jnp.dtype(out_dtype).itemsize
    sub = _sublane_granule(in_dtype)

    tm = max(sub, min(_round_up(tm_req, sub), _round_up(B, sub)))
    tn = max(_LANE, min(_round_up(tn_req, _LANE), _round_up(C, _LANE)))
    hp128 = _round_up(H, _LANE)

    def footprint(tm_, tn_, tk_, multi_k):
        x_b = tm_ * tk_ * itemsize
        w_b = tk_ * tn_ * itemsize
        b_b = tn_ * 4
        o_b = tm_ * tn_ * out_itemsize
        acc_b = tm_ * tn_ * 4 if multi_k else 0
        return 2 * (x_b + w_b + b_b + o_b) + acc_b

    # Prefer collapsing the whole reduction into a single K step.
    if footprint(tm, tn, hp128, False) <= _VMEM_WORKING_SET_BUDGET:
        tk = hp128
        multi_k = False
    else:
        multi_k = True
        tk = max(_LANE, min(_round_up(tk_req, _LANE), hp128))
        while footprint(tm, tn, tk, True) > _VMEM_WORKING_SET_BUDGET:
            if tk > _LANE:
                tk = max(_LANE, _round_up(tk // 2, _LANE))
            elif tn > _LANE:
                tn = max(_LANE, _round_up(tn // 2, _LANE))
            elif tm > sub:
                tm = max(sub, _round_up(tm // 2, sub))
            else:
                break

    # v7x megacore: ensure at least one "parallel" axis has >= 2 blocks.
    while pl.cdiv(B, tm) == 1 and pl.cdiv(C, tn) == 1:
        new_tn = max(_LANE, _round_up(tn // 2, _LANE))
        new_tm = max(sub, _round_up(tm // 2, sub))
        if new_tn < tn and pl.cdiv(C, new_tn) > 1:
            tn = new_tn
        elif new_tm < tm and pl.cdiv(B, new_tm) > 1:
            tm = new_tm
        else:
            break

    return tm, tn, tk, multi_k


def _weight_block_spec(block_shape, index_map, deep_buffer):
    if deep_buffer:
        try:
            return pl.BlockSpec(block_shape, index_map, pipeline_mode=pl.Buffered(3))
        except Exception:
            # Older jax without pipeline_mode / pl.Buffered: fall back to default 2-deep.
            pass
    return pl.BlockSpec(block_shape, index_map)


# ---------------------------------------------------------------------------
# Public wrapper
# ---------------------------------------------------------------------------

def multi_label_linear_head(
    x,
    weight,
    bias,
    dropout_p: float = 0.0,
    training: bool = False,
    *,
    tm: int = 512,
    tn: int = 512,
    tk: int = 1024,
    mxu_dtype=None,
    allow_xla_fallback: bool = True,
):
    """Forward pass of MultiLabelLinearHead: (optional Dropout) -> Linear.

    x:      (B, H) activations
    weight: (C, H) PyTorch-convention nn.Linear weight (NOT transposed)
    bias:   (C,)   nn.Linear bias
    mxu_dtype: optional lower-precision dtype (e.g. jnp.bfloat16) for the MXU
               operands; accumulation stays f32, output keeps x.dtype.
    """
    if training and dropout_p > 0.0:
        # TODO(synk): training-mode dropout (pltpu.prng_random_bits mask) not implemented.
        raise NotImplementedError("training-mode dropout not implemented in Pallas head")

    B, H = x.shape
    C, Hw = weight.shape
    assert Hw == H, f"weight hidden dim {Hw} != x hidden dim {H}"
    assert bias.shape == (C,)

    out_dtype = x.dtype

    # Tiny heads: pallas_call fixed overhead + K padding dwarf the math.
    if allow_xla_fallback and 2 * B * C * H < _TINY_FLOP_FALLBACK:
        return (x @ weight.T + bias).astype(out_dtype)

    in_dtype = jnp.dtype(mxu_dtype) if mxu_dtype is not None else jnp.dtype(x.dtype)
    # v7x MXU has no integer path; require float operands (dequantize outside).
    assert jnp.issubdtype(in_dtype, jnp.floating), (
        "integer MXU operands are not supported (no int path on v7x); dequantize first"
    )

    tm, tn, tk, multi_k = _select_tiling(B, C, H, in_dtype, out_dtype, tm, tn, tk)
    Hp = _round_up(H, tk)

    # One-time layout change: (C, H) -> (H, C) so the kernel contracts
    # LHS-last with RHS-first (no per-tile vxpose on the MXU path).
    xin = x.astype(in_dtype)
    wt = weight.T.astype(in_dtype)
    # Only the contraction axis needs zero padding; partial M/N edge blocks
    # are handled by masked writeback.
    if Hp != H:
        xin = jnp.pad(xin, ((0, 0), (0, Hp - H)))
        wt = jnp.pad(wt, ((0, Hp - H), (0, 0)))
    b2d = bias.astype(jnp.float32).reshape(1, C)

    n_i = pl.cdiv(B, tm)
    n_j = pl.cdiv(C, tn)
    n_k = Hp // tk

    itemsize = jnp.dtype(in_dtype).itemsize
    cost = pl.CostEstimate(
        flops=2 * B * C * H,
        transcendentals=0,
        bytes_accessed=(B * H + C * H) * itemsize
        + B * C * jnp.dtype(out_dtype).itemsize
        + C * 4,
    )

    # Small-batch shapes are weight-streaming bound: deepen the weight pipeline.
    deep_w = (n_i == 1) and (n_j * n_k >= 4)

    if multi_k:
        grid = (n_i, n_j, n_k)
        x_spec = pl.BlockSpec((tm, tk), lambda i, j, k: (i, k))
        w_spec = _weight_block_spec((tk, tn), lambda i, j, k: (k, j), deep_w)
        b_spec = pl.BlockSpec((1, tn), lambda i, j, k: (0, j))
        o_spec = pl.BlockSpec((tm, tn), lambda i, j, k: (i, j))
        kernel = _head_kernel_multi_k
        scratch = [pltpu.VMEM((tm, tn), jnp.float32)]
        dims = ("parallel", "parallel", "arbitrary")
    else:
        grid = (n_i, n_j)
        x_spec = pl.BlockSpec((tm, tk), lambda i, j: (i, 0))
        w_spec = _weight_block_spec((tk, tn), lambda i, j: (0, j), deep_w)
        b_spec = pl.BlockSpec((1, tn), lambda i, j: (0, j))
        o_spec = pl.BlockSpec((tm, tn), lambda i, j: (i, j))
        kernel = _head_kernel_single_k
        scratch = []
        dims = ("parallel", "parallel")

    out = pl.pallas_call(
        kernel,
        out_shape=jax.ShapeDtypeStruct((B, C), out_dtype),
        grid_spec=pltpu.PrefetchScalarGridSpec(
            num_scalar_prefetch=0,
            grid=grid,
            in_specs=[x_spec, w_spec, b_spec],
            out_specs=o_spec,
            scratch_shapes=scratch,
        ),
        compiler_params=pltpu.CompilerParams(
            dimension_semantics=dims,
            vmem_limit_bytes=_VMEM_LIMIT_BYTES,
        ),
        cost_estimate=cost,
    )(xin, wt, b2d)
    return out


# ---------------------------------------------------------------------------
# Self-test
# ---------------------------------------------------------------------------

if __name__ == "__main__":
    key = jax.random.PRNGKey(0)

    def init_head(k, hidden, classes):
        kw, kb = jax.random.split(k)
        bound = 1.0 / math.sqrt(hidden)
        w = jax.random.uniform(kw, (classes, hidden), jnp.float32, -bound, bound)
        b = jax.random.uniform(kb, (classes,), jnp.float32, -bound, bound)
        return w, b

    # (batch, hidden_size, num_classes, force_pallas)
    checks = [
        (2, 32, 8, True),        # module's tiny shapes -> force the Pallas path
        (256, 768, 400, False),  # typical head; exercises megacore split + M/N edge blocks
        (4, 512, 2000, False),   # small batch, many classes; exercises deep weight buffering
    ]

    for idx, (batch, hidden, classes, force) in enumerate(checks):
        key, k_x, k_p = jax.random.split(key, 3)
        weight, bias = init_head(k_p, hidden, classes)
        x = jax.random.normal(k_x, (batch, hidden), jnp.float32)

        out = multi_label_linear_head(
            x, weight, bias, dropout_p=0.0, allow_xla_fallback=not force
        )
        out = jax.block_until_ready(out)

        ref = x @ weight.T + bias
        assert out.shape == (batch, classes), f"case {idx}: bad shape {out.shape}"
        err = float(jnp.max(jnp.abs(out - ref)))
        assert jnp.allclose(out, ref, atol=1e-4, rtol=1e-4), (
            f"case {idx}: max abs err {err}"
        )

    print("KERNEL_OK")
</pallas_src>

<mosaic_0001>
module attributes {stable_mosaic.version = 11 : i64} {
  func.func @_head_kernel_single_k(%arg0: i32, %arg1: i32, %arg2: memref<8x128xf32, #tpu.memory_space<vmem>>, %arg3: memref<128x128xf32, #tpu.memory_space<vmem>>, %arg4: memref<1x128xf32, #tpu.memory_space<vmem>>, %arg5: memref<8x128xf32, #tpu.memory_space<vmem>>) attributes {dimension_semantics = [#tpu.dimension_semantics<parallel>, #tpu.dimension_semantics<parallel>], iteration_bounds = array<i64: 1, 1>, scalar_prefetch = 0 : i64, scratch_operands = 0 : i64, tpu.core_type = #tpu.core_type<tc>, window_params = [{transform_indices = @transform_0, window_bounds = array<i64: 8, 128>}, {transform_indices = @transform_1, window_bounds = array<i64: 128, 128>}, {transform_indices = @transform_2, window_bounds = array<i64: 1, 128>}, {transform_indices = @transform_3, window_bounds = array<i64: 8, 128>}]} {
    %c0 = arith.constant 0 : index
    %c0_0 = arith.constant 0 : index
    %0 = vector.load %arg2[%c0, %c0_0] : memref<8x128xf32, #tpu.memory_space<vmem>>, vector<8x128xf32>
    %c0_1 = arith.constant 0 : index
    %c0_2 = arith.constant 0 : index
    %1 = vector.load %arg3[%c0_1, %c0_2] : memref<128x128xf32, #tpu.memory_space<vmem>>, vector<128x128xf32>
    %cst = arith.constant dense<0.000000e+00> : vector<8x128xf32>
    %2 = tpu.matmul %0, %1, %cst {dimension_numbers = #tpu.dot_dimension_numbers<[1], [0], [0], [1], [0, 0, 1, 1], [], []>} : vector<8x128xf32>, vector<128x128xf32>, vector<8x128xf32> -> vector<8x128xf32>
    %c0_3 = arith.constant 0 : index
    %c0_4 = arith.constant 0 : index
    %3 = vector.load %arg4[%c0_3, %c0_4] : memref<1x128xf32, #tpu.memory_space<vmem>>, vector<1x128xf32>
    %4 = vector.broadcast %3 : vector<1x128xf32> to vector<8x128xf32>
    %5 = arith.addf %2, %4 : vector<8x128xf32>
    %c0_5 = arith.constant 0 : index
    %c0_6 = arith.constant 0 : index
    %6 = vector.load %arg5[%c0_5, %c0_6] : memref<8x128xf32, #tpu.memory_space<vmem>>, vector<8x128xf32>
    tpu.vector_store %arg5[%c0_5, %c0_6], %5 {strides = array<i32>} : memref<8x128xf32, #tpu.memory_space<vmem>>, vector<8x128xf32>,
    return
  }
  func.func @transform_0(%arg0: i32, %arg1: i32) -> (i32, i32) {
    %c0_i32 = arith.constant 0 : i32
    %c0_i32_0 = arith.constant 0 : i32
    return %arg0, %c0_i32 : i32, i32
  }
  func.func @transform_1(%arg0: i32, %arg1: i32) -> (i32, i32) {
    %c0_i32 = arith.constant 0 : i32
    %c0_i32_0 = arith.constant 0 : i32
    return %c0_i32, %arg1 : i32, i32
  }
  func.func @transform_2(%arg0: i32, %arg1: i32) -> (i32, i32) {
    %c0_i32 = arith.constant 0 : i32
    %c0_i32_0 = arith.constant 0 : i32
    return %c0_i32, %arg1 : i32, i32
  }
  func.func @transform_3(%arg0: i32, %arg1: i32) -> (i32, i32) {
    %c0_i32 = arith.constant 0 : i32
    return %arg0, %arg1 : i32, i32
  }
}

</mosaic_0001>

<llo_original>
// kernel: tpu_custom_call.1
$region0: #{tpu_custom_call.1}
  #allocation0 [shape = 'u32[]', space=smem, size = 0x4, offset = 0x4, fixed_abs, tag = 'smem constant byte address 0x4 - core index']
  #allocation1 [shape = 'u32[144,128]{1,0:T(1,128)}', space=vmem, size = 0x12000, scoped, tag = 'internal scratch']
  %s0 = inlined_call_operand.vmem [shape: f32[2,128], index: 0, kind: input, shape index: {}]
  %s1 = inlined_call_operand.vmem [shape: f32[128,8], index: 1, kind: input, shape index: {}]
  %s2 = inlined_call_operand.vmem [shape: f32[1,8], index: 2, kind: input, shape index: {}]
  %s3 = inlined_call_operand.hbm [shape: f32[2,8], index: 3, kind: output, shape index: {}]
  %s4 = sld [smem:[#allocation0]]
  $region22: #{tpu_custom_call.1} parent=0
    _
  %s6 = ssub.s32 1, %s4
  %s7 = scalar_select 0, %s6, %s4
  $region1: #{tpu_custom_call.1} parent=0
    #allocation2 [shape = 'u8[4096]{0}', space=vmem, size = 0x1000, scoped, tag = 'output window, operand 0, single buffered']
    #allocation3 [shape = 's32[1]{0}', space=sflag, size = 0x4, scoped, tag = 'scoped memory for tpu_custom_call.1']
    %8 = vsyncpa [#allocation3], 0
    // Predicated region
    $region2: #{tpu_custom_call.1} parent=1 // pred_check
      _
    $region3: #{tpu_custom_call.1} parent=1 // pred_check_branch
      %10 = sbr.rel (0) target = $region5
    $region4: #{tpu_custom_call.1} parent=1 // pred_region
      _
    $region5: #{tpu_custom_call.1} parent=1 // pred_fallthru
      _
    // Predicated region
    $region6: #{tpu_custom_call.1} parent=1 // pred_check
      _
    $region7: #{tpu_custom_call.1} parent=1 // pred_check_branch
      %12 = sbr.rel (0) target = $region9
    $region8: #{tpu_custom_call.1} parent=1 // pred_region
      _
    $region9: #{tpu_custom_call.1} parent=1 // pred_fallthru
      _
    // Predicated region
    $region10: #{tpu_custom_call.1} parent=1 // pred_check
      _
    $region11: #{tpu_custom_call.1} parent=1 // pred_check_branch
      %14 = sbr.rel (0) target = $region13
    $region12: #{tpu_custom_call.1} parent=1 // pred_region
      _
    $region13: #{tpu_custom_call.1} parent=1 // pred_fallthru
      _
    %v15 = vld [vmem:[%s0] sm:$0xff]
    %v16 = vld [vmem:[%s1] sm:$0xff]
    %v17 = vld [vmem:[%s1 + $0x8] sm:$0xff]
    %v18 = vld [vmem:[%s1 + $0x10] sm:$0xff]
    %v19 = vld [vmem:[%s1 + $0x18] sm:$0xff]
    %v20 = vld [vmem:[%s1 + $0x20] sm:$0xff]
    %v21 = vld [vmem:[%s1 + $0x28] sm:$0xff]
    %v22 = vld [vmem:[%s1 + $0x30] sm:$0xff]
    %v23 = vld [vmem:[%s1 + $0x38] sm:$0xff]
    %v24 = vld [vmem:[%s1 + $0x40] sm:$0xff]
    %v25 = vld [vmem:[%s1 + $0x48] sm:$0xff]
    %v26 = vld [vmem:[%s1 + $0x50] sm:$0xff]
    %v27 = vld [vmem:[%s1 + $0x58] sm:$0xff]
    %v28 = vld [vmem:[%s1 + $0x60] sm:$0xff]
    %v29 = vld [vmem:[%s1 + $0x68] sm:$0xff]
    %v30 = vld [vmem:[%s1 + $0x70] sm:$0xff]
    %v31 = vld [vmem:[%s1 + $0x78] sm:$0xff]
    %v32 = vld [vmem:[%s2] sm:$0x1]
    %v34 = vlaneseq
    %v35 = vshrl.u32 %v34, 7
    %v36 = vsub.s32 0, %v35
    %v37 = vrot.slane %v32, %v36
    %39 = vmatprep.subr.mxu0 0.0
    %40 = vmatpush1.msra.mxu0 %v16
    %41 = vmatprep.subr.mxu0 0.0
    %42 = vmatpush1.msra.mxu0 %v17
    %43 = vmatprep.subr.mxu0 0.0
    %44 = vmatpush1.msra.mxu0 %v18
    %45 = vmatprep.subr.mxu0 0.0
    %46 = vmatpush1.msra.mxu0 %v19
    %47 = vmatprep.subr.mxu0 0.0
    %48 = vmatpush1.msra.mxu0 %v20
    %49 = vmatprep.subr.mxu0 0.0
    %50 = vmatpush1.msra.mxu0 %v21
    %51 = vmatprep.subr.mxu0 0.0
    %52 = vmatpush1.msra.mxu0 %v22
    %53 = vmatprep.subr.mxu0 0.0
    %54 = vmatpush1.msra.mxu0 %v23
    %55 = vmatprep.subr.mxu0 0.0
    %56 = vmatpush1.msra.mxu0 %v24
    %57 = vmatprep.subr.mxu0 0.0
    %58 = vmatpush1.msra.mxu0 %v25
    %59 = vmatprep.subr.mxu0 0.0
    %60 = vmatpush1.msra.mxu0 %v26
    %61 = vmatprep.subr.mxu0 0.0
    %62 = vmatpush1.msra.mxu0 %v27
    %63 = vmatprep.subr.mxu0 0.0
    %64 = vmatpush1.msra.mxu0 %v28
    %65 = vmatprep.subr.mxu0 0.0
    %66 = vmatpush1.msra.mxu0 %v29
    %67 = vmatprep.subr.mxu0 0.0
    %68 = vmatpush1.msra.mxu0 %v30
    %69 = vmatprep.subr.mxu0 0.0
    %70 = vmatpush1.msra.mxu0 %v31
    %71 = vmatprep.subr.mxu0 0.0
    %72 = vmatpush1.msra.mxu0 0.0
    %73 = vmatprep.subr.mxu0 0.0
    %74 = vmatpush1.msra.mxu0 0.0
    %75 = vmatprep.subr.mxu0 0.0
    %76 = vmatpush1.msra.mxu0 0.0
    %77 = vmatprep.subr.mxu0 0.0
    %78 = vmatpush1.msra.mxu0 0.0
    %79 = vmatprep.subr.mxu0 0.0
    %80 = vmatpush1.msra.mxu0 0.0
    %81 = vmatprep.subr.mxu0 0.0
    %82 = vmatpush1.msra.mxu0 0.0
    %83 = vmatprep.subr.mxu0 0.0
    %84 = vmatpush1.msra.mxu0 0.0
    %85 = vmatprep.subr.mxu0 0.0
    %86 = vmatpush1.msra.mxu0 0.0
    %87 = vmatprep.subr.mxu0 0.0
    %88 = vmatpush1.msra.mxu0 0.0
    %89 = vmatprep.subr.mxu0 0.0
    %90 = vmatpush1.msra.mxu0 0.0
    %91 = vmatprep.subr.mxu0 0.0
    %92 = vmatpush1.msra.mxu0 0.0
    %93 = vmatprep.subr.mxu0 0.0
    %94 = vmatpush1.msra.mxu0 0.0
    %95 = vmatprep.subr.mxu0 0.0
    %96 = vmatpush1.msra.mxu0 0.0
    %97 = vmatprep.subr.mxu0 0.0
    %98 = vmatpush1.msra.mxu0 0.0
    %99 = vmatprep.subr.mxu0 0.0
    %100 = vmatpush1.msra.mxu0 0.0
    %101 = vmatprep.subr.mxu0 0.0
    %102 = vmatpush1.msra.mxu0 0.0
    %103 = vmatprep.mubr.f32.mxu0 0.0
    %104 = vmatmul.mubr.f32.gmra.mrb[0].mxu0 %v15
    %v105 = vpop.f32.mrb[0].mxu0
    %v106 = vadd.f32 %v37, %v105
    %v107 = vpop.f32.mrb[0].mxu0
    %108 = vdwg.mxu0
    %109 = vst [vmem:[#allocation2] sm:$0xff] %v106
    // Predicated region
    $region14: #{tpu_custom_call.1} parent=1 // pred_check
      _
    $region15: #{tpu_custom_call.1} parent=1 // pred_check_branch
      %111 = sbr.rel (0) target = $region17
    $region16: #{tpu_custom_call.1} parent=1 // pred_region
      %s113 = ssub.s32 128, 32
      %114 = vsyncadd [#allocation3], %s113
      %s115 = sshll.u32 [#allocation2], 4
      %s116 = int_to_ptr.vmem [resolvable:$true] %s115
      %121 = dma.vmem_to_hbm [thread:$0]  %s116, 32, %s3, [#allocation3], 32, 32, 2
    $region17: #{tpu_custom_call.1} parent=1 // pred_fallthru
      _
    // Predicated region
    $region18: #{tpu_custom_call.1} parent=1 // pred_check
      _
    $region19: #{tpu_custom_call.1} parent=1 // pred_check_branch
      %123 = sbr.rel (0) target = $region21
    $region20: #{tpu_custom_call.1} parent=1 // pred_region
      %124 = dma.done [#allocation3], 128
    $region21: #{tpu_custom_call.1} parent=1 // pred_fallthru
      _
    %125 = vsyncpa [#allocation3], 1

</llo_original>
